<compile_context>
chip_gen: v7x
topology: tpu7x:2x2x1
jax: 0.10.0
libtpu: 0.0.40
codegen_flags: <defaults>
</compile_context>

<pallas_src>
import jax
import jax.numpy as jnp
from jax.experimental import pallas as pl
from jax.experimental.pallas import tpu as pltpu

INPUT = 4
HIDDEN = 4
OUT = 5


def lstm_fc_kernel(x_ref, wih_t_ref, whh_t_ref, b_ref, fcw_t_ref, fcb_ref,
                   o_ref, h_scratch):
    """Single-layer LSTM (PyTorch gate order i, f, g, o) followed by a Linear.

    x_ref:     (T, I)      input sequence
    wih_t_ref: (I, 4H)     W_ih^T (pre-transposed in wrapper)
    whh_t_ref: (H, 4H)     W_hh^T (pre-transposed in wrapper)
    b_ref:     (1, 4H)     b_ih + b_hh
    fcw_t_ref: (H, OUT)    fc1.weight^T (pre-transposed in wrapper)
    fcb_ref:   (1, OUT)    fc1.bias
    o_ref:     (T, OUT)    output
    h_scratch: (T, H)      VMEM scratch holding every timestep's hidden state
    """
    x = x_ref[...]
    wih_t = wih_t_ref[...]
    whh_t = whh_t_ref[...]
    b = b_ref[...]

    T = x.shape[0]
    H = HIDDEN

    # Input contribution to all gates, for every timestep at once (one MXU matmul).
    xg = jnp.dot(x, wih_t, preferred_element_type=jnp.float32) + b  # (T, 4H)

    h = jnp.zeros((1, H), jnp.float32)
    c = jnp.zeros((1, H), jnp.float32)

    # T is static at trace time: fully unrolled recurrence, static slices only.
    for t in range(T):
        gates = xg[t:t + 1, :] + jnp.dot(
            h, whh_t, preferred_element_type=jnp.float32)          # (1, 4H)
        # One sigmoid + one tanh over the full gate vector (2 EUP pushes/step).
        sig = jax.nn.sigmoid(gates)
        tnh = jnp.tanh(gates)
        i_g = sig[:, 0 * H:1 * H]
        f_g = sig[:, 1 * H:2 * H]
        g_g = tnh[:, 2 * H:3 * H]
        o_g = sig[:, 3 * H:4 * H]
        c = f_g * c + i_g * g_g
        h = o_g * jnp.tanh(c)
        # Store off the carry chain; static index, consumed only after the loop.
        h_scratch[t:t + 1, :] = h

    # fc1 hoisted out of the loop: one matmul, one bias add, one dense store.
    hs = h_scratch[...]                                             # (T, H)
    y = jnp.dot(hs, fcw_t_ref[...], preferred_element_type=jnp.float32)
    o_ref[...] = y + fcb_ref[...]


def net_forward(x, params):
    """x: (T, 1, I) float32 (PyTorch LSTM layout with batch=1). Returns (T, OUT)."""
    wih, whh, bih, bhh, fcw, fcb = params
    T = x.shape[0]
    x2 = x[:, 0, :].astype(jnp.float32)                   # (T, I)
    # Pre-transpose all weights in the wrapper (no transposes inside the kernel).
    wih_t = wih.T.astype(jnp.float32)                     # (I, 4H)
    whh_t = whh.T.astype(jnp.float32)                     # (H, 4H)
    fcw_t = fcw.T.astype(jnp.float32)                     # (H, OUT)
    b = (bih + bhh).reshape(1, 4 * HIDDEN).astype(jnp.float32)
    fcb2 = fcb.reshape(1, OUT).astype(jnp.float32)

    return pl.pallas_call(
        lstm_fc_kernel,
        out_shape=jax.ShapeDtypeStruct((T, OUT), jnp.float32),
        in_specs=[pl.BlockSpec(memory_space=pltpu.MemorySpace.VMEM)] * 6,
        out_specs=pl.BlockSpec(memory_space=pltpu.MemorySpace.VMEM),
        scratch_shapes=[pltpu.VMEM((T, HIDDEN), jnp.float32)],
    )(x2, wih_t, whh_t, b, fcw_t, fcb2)


def net_forward_ref(x, params):
    """Pure-JAX reference mirroring PyTorch semantics (for correctness check)."""
    wih, whh, bih, bhh, fcw, fcb = params
    T = x.shape[0]
    xs = x[:, 0, :]
    h = jnp.zeros((HIDDEN,), jnp.float32)
    c = jnp.zeros((HIDDEN,), jnp.float32)
    outs = []
    for t in range(T):
        gates = wih @ xs[t] + bih + whh @ h + bhh
        i_g = jax.nn.sigmoid(gates[0 * HIDDEN:1 * HIDDEN])
        f_g = jax.nn.sigmoid(gates[1 * HIDDEN:2 * HIDDEN])
        g_g = jnp.tanh(gates[2 * HIDDEN:3 * HIDDEN])
        o_g = jax.nn.sigmoid(gates[3 * HIDDEN:4 * HIDDEN])
        c = f_g * c + i_g * g_g
        h = o_g * jnp.tanh(c)
        outs.append(fcw @ h + fcb)
    return jnp.stack(outs)


def init_params(key):
    # Deterministic init matching PyTorch shapes; uniform(-1/sqrt(H), 1/sqrt(H)).
    k = 1.0 / jnp.sqrt(jnp.float32(HIDDEN))
    ks = jax.random.split(key, 6)
    wih = jax.random.uniform(ks[0], (4 * HIDDEN, INPUT), jnp.float32, -k, k)
    whh = jax.random.uniform(ks[1], (4 * HIDDEN, HIDDEN), jnp.float32, -k, k)
    bih = jax.random.uniform(ks[2], (4 * HIDDEN,), jnp.float32, -k, k)
    bhh = jax.random.uniform(ks[3], (4 * HIDDEN,), jnp.float32, -k, k)
    fcw = jax.random.uniform(ks[4], (OUT, HIDDEN), jnp.float32, -k, k)
    fcb = jax.random.uniform(ks[5], (OUT,), jnp.float32, -k, k)
    return (wih, whh, bih, bhh, fcw, fcb)


if __name__ == "__main__":
    key = jax.random.PRNGKey(0)
    k_param, k_x = jax.random.split(key)
    params = init_params(k_param)

    T = 8  # seq_len; batch must be 1 for the .view in forward()
    x = jax.random.normal(k_x, (T, 1, INPUT), jnp.float32)

    out = net_forward(x, params)
    out = jax.block_until_ready(out)

    ref = net_forward_ref(x, params)
    assert out.shape == (T, OUT)
    assert jnp.allclose(out, ref, atol=1e-5, rtol=1e-5)

    print("KERNEL_OK")
</pallas_src>

<mosaic_0001>
module attributes {stable_mosaic.version = 11 : i64} {
  func.func @lstm_fc_kernel(%arg0: memref<8x4xf32, #tpu.memory_space<vmem>>, %arg1: memref<4x16xf32, #tpu.memory_space<vmem>>, %arg2: memref<4x16xf32, #tpu.memory_space<vmem>>, %arg3: memref<1x16xf32, #tpu.memory_space<vmem>>, %arg4: memref<4x5xf32, #tpu.memory_space<vmem>>, %arg5: memref<1x5xf32, #tpu.memory_space<vmem>>, %arg6: memref<8x5xf32, #tpu.memory_space<vmem>>, %arg7: memref<8x4xf32, #tpu.memory_space<vmem>>) attributes {dimension_semantics = [], scalar_prefetch = 0 : i64, scratch_operands = 1 : i64, tpu.core_type = #tpu.core_type<tc>} {
    %c0 = arith.constant 0 : index
    %c0_0 = arith.constant 0 : index
    %0 = vector.load %arg0[%c0, %c0_0] : memref<8x4xf32, #tpu.memory_space<vmem>>, vector<8x4xf32>
    %c0_1 = arith.constant 0 : index
    %c0_2 = arith.constant 0 : index
    %1 = vector.load %arg1[%c0_1, %c0_2] : memref<4x16xf32, #tpu.memory_space<vmem>>, vector<4x16xf32>
    %c0_3 = arith.constant 0 : index
    %c0_4 = arith.constant 0 : index
    %2 = vector.load %arg2[%c0_3, %c0_4] : memref<4x16xf32, #tpu.memory_space<vmem>>, vector<4x16xf32>
    %c0_5 = arith.constant 0 : index
    %c0_6 = arith.constant 0 : index
    %3 = vector.load %arg3[%c0_5, %c0_6] : memref<1x16xf32, #tpu.memory_space<vmem>>, vector<1x16xf32>
    %cst = arith.constant dense<0.000000e+00> : vector<8x16xf32>
    %4 = tpu.matmul %0, %1, %cst {dimension_numbers = #tpu.dot_dimension_numbers<[1], [0], [0], [1], [0, 0, 1, 1], [], []>} : vector<8x4xf32>, vector<4x16xf32>, vector<8x16xf32> -> vector<8x16xf32>
    %5 = vector.broadcast %3 : vector<1x16xf32> to vector<8x16xf32>
    %6 = arith.addf %4, %5 : vector<8x16xf32>
    %cst_7 = arith.constant 0.000000e+00 : f32
    %7 = vector.broadcast %cst_7 : f32 to vector<1x4xf32>
    %cst_8 = arith.constant 0.000000e+00 : f32
    %8 = vector.broadcast %cst_8 : f32 to vector<1x4xf32>
    %9 = vector.extract_strided_slice %6 {offsets = [0, 0], sizes = [1, 16], strides = [1, 1]} : vector<8x16xf32> to vector<1x16xf32>
    %cst_9 = arith.constant dense<0.000000e+00> : vector<1x16xf32>
    %10 = tpu.matmul %7, %2, %cst_9 {dimension_numbers = #tpu.dot_dimension_numbers<[1], [0], [0], [1], [0, 0, 1, 1], [], []>} : vector<1x4xf32>, vector<4x16xf32>, vector<1x16xf32> -> vector<1x16xf32>
    %11 = arith.addf %9, %10 : vector<1x16xf32>
    %12 = arith.negf %11 : vector<1x16xf32>
    %13 = math.exp %12 : vector<1x16xf32>
    %cst_10 = arith.constant 1.000000e+00 : f32
    %14 = vector.broadcast %cst_10 : f32 to vector<1x16xf32>
    %15 = arith.addf %14, %13 : vector<1x16xf32>
    %16 = arith.divf %14, %15 : vector<1x16xf32>
    %17 = math.tanh %11 : vector<1x16xf32>
    %18 = vector.extract_strided_slice %16 {offsets = [0, 0], sizes = [1, 4], strides = [1, 1]} : vector<1x16xf32> to vector<1x4xf32>
    %19 = vector.extract_strided_slice %16 {offsets = [0, 4], sizes = [1, 4], strides = [1, 1]} : vector<1x16xf32> to vector<1x4xf32>
    %20 = vector.extract_strided_slice %17 {offsets = [0, 8], sizes = [1, 4], strides = [1, 1]} : vector<1x16xf32> to vector<1x4xf32>
    %21 = vector.extract_strided_slice %16 {offsets = [0, 12], sizes = [1, 4], strides = [1, 1]} : vector<1x16xf32> to vector<1x4xf32>
    %22 = arith.mulf %19, %8 : vector<1x4xf32>
    %23 = arith.mulf %18, %20 : vector<1x4xf32>
    %24 = arith.addf %22, %23 : vector<1x4xf32>
    %25 = math.tanh %24 : vector<1x4xf32>
    %26 = arith.mulf %21, %25 : vector<1x4xf32>
    %c0_11 = arith.constant 0 : index
    %c0_12 = arith.constant 0 : index
    %27 = vector.load %arg7[%c0_11, %c0_12] : memref<8x4xf32, #tpu.memory_space<vmem>>, vector<1x4xf32>
    tpu.vector_store %arg7[%c0_11, %c0_12], %26 {strides = array<i32>} : memref<8x4xf32, #tpu.memory_space<vmem>>, vector<1x4xf32>,
    %28 = vector.extract_strided_slice %6 {offsets = [1, 0], sizes = [1, 16], strides = [1, 1]} : vector<8x16xf32> to vector<1x16xf32>
    %cst_13 = arith.constant dense<0.000000e+00> : vector<1x16xf32>
    %29 = tpu.matmul %26, %2, %cst_13 {dimension_numbers = #tpu.dot_dimension_numbers<[1], [0], [0], [1], [0, 0, 1, 1], [], []>} : vector<1x4xf32>, vector<4x16xf32>, vector<1x16xf32> -> vector<1x16xf32>
    %30 = arith.addf %28, %29 : vector<1x16xf32>
    %31 = arith.negf %30 : vector<1x16xf32>
    %32 = math.exp %31 : vector<1x16xf32>
    %cst_14 = arith.constant 1.000000e+00 : f32
    %33 = vector.broadcast %cst_14 : f32 to vector<1x16xf32>
    %34 = arith.addf %33, %32 : vector<1x16xf32>
    %35 = arith.divf %33, %34 : vector<1x16xf32>
    %36 = math.tanh %30 : vector<1x16xf32>
    %37 = vector.extract_strided_slice %35 {offsets = [0, 0], sizes = [1, 4], strides = [1, 1]} : vector<1x16xf32> to vector<1x4xf32>
    %38 = vector.extract_strided_slice %35 {offsets = [0, 4], sizes = [1, 4], strides = [1, 1]} : vector<1x16xf32> to vector<1x4xf32>
    %39 = vector.extract_strided_slice %36 {offsets = [0, 8], sizes = [1, 4], strides = [1, 1]} : vector<1x16xf32> to vector<1x4xf32>
    %40 = vector.extract_strided_slice %35 {offsets = [0, 12], sizes = [1, 4], strides = [1, 1]} : vector<1x16xf32> to vector<1x4xf32>
    %41 = arith.mulf %38, %24 : vector<1x4xf32>
    %42 = arith.mulf %37, %39 : vector<1x4xf32>
    %43 = arith.addf %41, %42 : vector<1x4xf32>
    %44 = math.tanh %43 : vector<1x4xf32>
    %45 = arith.mulf %40, %44 : vector<1x4xf32>
    %c1 = arith.constant 1 : index
    %c0_15 = arith.constant 0 : index
    %46 = vector.load %arg7[%c1, %c0_15] : memref<8x4xf32, #tpu.memory_space<vmem>>, vector<1x4xf32>
    tpu.vector_store %arg7[%c1, %c0_15], %45 {strides = array<i32>} : memref<8x4xf32, #tpu.memory_space<vmem>>, vector<1x4xf32>,
    %47 = vector.extract_strided_slice %6 {offsets = [2, 0], sizes = [1, 16], strides = [1, 1]} : vector<8x16xf32> to vector<1x16xf32>
    %cst_16 = arith.constant dense<0.000000e+00> : vector<1x16xf32>
    %48 = tpu.matmul %45, %2, %cst_16 {dimension_numbers = #tpu.dot_dimension_numbers<[1], [0], [0], [1], [0, 0, 1, 1], [], []>} : vector<1x4xf32>, vector<4x16xf32>, vector<1x16xf32> -> vector<1x16xf32>
    %49 = arith.addf %47, %48 : vector<1x16xf32>
    %50 = arith.negf %49 : vector<1x16xf32>
    %51 = math.exp %50 : vector<1x16xf32>
    %cst_17 = arith.constant 1.000000e+00 : f32
    %52 = vector.broadcast %cst_17 : f32 to vector<1x16xf32>
    %53 = arith.addf %52, %51 : vector<1x16xf32>
    %54 = arith.divf %52, %53 : vector<1x16xf32>
    %55 = math.tanh %49 : vector<1x16xf32>
    %56 = vector.extract_strided_slice %54 {offsets = [0, 0], sizes = [1, 4], strides = [1, 1]} : vector<1x16xf32> to vector<1x4xf32>
    %57 = vector.extract_strided_slice %54 {offsets = [0, 4], sizes = [1, 4], strides = [1, 1]} : vector<1x16xf32> to vector<1x4xf32>
    %58 = vector.extract_strided_slice %55 {offsets = [0, 8], sizes = [1, 4], strides = [1, 1]} : vector<1x16xf32> to vector<1x4xf32>
    %59 = vector.extract_strided_slice %54 {offsets = [0, 12], sizes = [1, 4], strides = [1, 1]} : vector<1x16xf32> to vector<1x4xf32>
    %60 = arith.mulf %57, %43 : vector<1x4xf32>
    %61 = arith.mulf %56, %58 : vector<1x4xf32>
    %62 = arith.addf %60, %61 : vector<1x4xf32>
    %63 = math.tanh %62 : vector<1x4xf32>
    %64 = arith.mulf %59, %63 : vector<1x4xf32>
    %c2 = arith.constant 2 : index
    %c0_18 = arith.constant 0 : index
    %65 = vector.load %arg7[%c2, %c0_18] : memref<8x4xf32, #tpu.memory_space<vmem>>, vector<1x4xf32>
    tpu.vector_store %arg7[%c2, %c0_18], %64 {strides = array<i32>} : memref<8x4xf32, #tpu.memory_space<vmem>>, vector<1x4xf32>,
    %66 = vector.extract_strided_slice %6 {offsets = [3, 0], sizes = [1, 16], strides = [1, 1]} : vector<8x16xf32> to vector<1x16xf32>
    %cst_19 = arith.constant dense<0.000000e+00> : vector<1x16xf32>
    %67 = tpu.matmul %64, %2, %cst_19 {dimension_numbers = #tpu.dot_dimension_numbers<[1], [0], [0], [1], [0, 0, 1, 1], [], []>} : vector<1x4xf32>, vector<4x16xf32>, vector<1x16xf32> -> vector<1x16xf32>
    %68 = arith.addf %66, %67 : vector<1x16xf32>
    %69 = arith.negf %68 : vector<1x16xf32>
    %70 = math.exp %69 : vector<1x16xf32>
    %cst_20 = arith.constant 1.000000e+00 : f32
    %71 = vector.broadcast %cst_20 : f32 to vector<1x16xf32>
    %72 = arith.addf %71, %70 : vector<1x16xf32>
    %73 = arith.divf %71, %72 : vector<1x16xf32>
    %74 = math.tanh %68 : vector<1x16xf32>
    %75 = vector.extract_strided_slice %73 {offsets = [0, 0], sizes = [1, 4], strides = [1, 1]} : vector<1x16xf32> to vector<1x4xf32>
    %76 = vector.extract_strided_slice %73 {offsets = [0, 4], sizes = [1, 4], strides = [1, 1]} : vector<1x16xf32> to vector<1x4xf32>
    %77 = vector.extract_strided_slice %74 {offsets = [0, 8], sizes = [1, 4], strides = [1, 1]} : vector<1x16xf32> to vector<1x4xf32>
    %78 = vector.extract_strided_slice %73 {offsets = [0, 12], sizes = [1, 4], strides = [1, 1]} : vector<1x16xf32> to vector<1x4xf32>
    %79 = arith.mulf %76, %62 : vector<1x4xf32>
    %80 = arith.mulf %75, %77 : vector<1x4xf32>
    %81 = arith.addf %79, %80 : vector<1x4xf32>
    %82 = math.tanh %81 : vector<1x4xf32>
    %83 = arith.mulf %78, %82 : vector<1x4xf32>
    %c3 = arith.constant 3 : index
    %c0_21 = arith.constant 0 : index
    %84 = vector.load %arg7[%c3, %c0_21] : memref<8x4xf32, #tpu.memory_space<vmem>>, vector<1x4xf32>
    tpu.vector_store %arg7[%c3, %c0_21], %83 {strides = array<i32>} : memref<8x4xf32, #tpu.memory_space<vmem>>, vector<1x4xf32>,
    %85 = vector.extract_strided_slice %6 {offsets = [4, 0], sizes = [1, 16], strides = [1, 1]} : vector<8x16xf32> to vector<1x16xf32>
    %cst_22 = arith.constant dense<0.000000e+00> : vector<1x16xf32>
    %86 = tpu.matmul %83, %2, %cst_22 {dimension_numbers = #tpu.dot_dimension_numbers<[1], [0], [0], [1], [0, 0, 1, 1], [], []>} : vector<1x4xf32>, vector<4x16xf32>, vector<1x16xf32> -> vector<1x16xf32>
    %87 = arith.addf %85, %86 : vector<1x16xf32>
    %88 = arith.negf %87 : vector<1x16xf32>
    %89 = math.exp %88 : vector<1x16xf32>
    %cst_23 = arith.constant 1.000000e+00 : f32
    %90 = vector.broadcast %cst_23 : f32 to vector<1x16xf32>
    %91 = arith.addf %90, %89 : vector<1x16xf32>
    %92 = arith.divf %90, %91 : vector<1x16xf32>
    %93 = math.tanh %87 : vector<1x16xf32>
    %94 = vector.extract_strided_slice %92 {offsets = [0, 0], sizes = [1, 4], strides = [1, 1]} : vector<1x16xf32> to vector<1x4xf32>
    %95 = vector.extract_strided_slice %92 {offsets = [0, 4], sizes = [1, 4], strides = [1, 1]} : vector<1x16xf32> to vector<1x4xf32>
    %96 = vector.extract_strided_slice %93 {offsets = [0, 8], sizes = [1, 4], strides = [1, 1]} : vector<1x16xf32> to vector<1x4xf32>
    %97 = vector.extract_strided_slice %92 {offsets = [0, 12], sizes = [1, 4], strides = [1, 1]} : vector<1x16xf32> to vector<1x4xf32>
    %98 = arith.mulf %95, %81 : vector<1x4xf32>
    %99 = arith.mulf %94, %96 : vector<1x4xf32>
    %100 = arith.addf %98, %99 : vector<1x4xf32>
    %101 = math.tanh %100 : vector<1x4xf32>
    %102 = arith.mulf %97, %101 : vector<1x4xf32>
    %c4 = arith.constant 4 : index
    %c0_24 = arith.constant 0 : index
    %103 = vector.load %arg7[%c4, %c0_24] : memref<8x4xf32, #tpu.memory_space<vmem>>, vector<1x4xf32>
    tpu.vector_store %arg7[%c4, %c0_24], %102 {strides = array<i32>} : memref<8x4xf32, #tpu.memory_space<vmem>>, vector<1x4xf32>,
    %104 = vector.extract_strided_slice %6 {offsets = [5, 0], sizes = [1, 16], strides = [1, 1]} : vector<8x16xf32> to vector<1x16xf32>
    %cst_25 = arith.constant dense<0.000000e+00> : vector<1x16xf32>
    %105 = tpu.matmul %102, %2, %cst_25 {dimension_numbers = #tpu.dot_dimension_numbers<[1], [0], [0], [1], [0, 0, 1, 1], [], []>} : vector<1x4xf32>, vector<4x16xf32>, vector<1x16xf32> -> vector<1x16xf32>
    %106 = arith.addf %104, %105 : vector<1x16xf32>
    %107 = arith.negf %106 : vector<1x16xf32>
    %108 = math.exp %107 : vector<1x16xf32>
    %cst_26 = arith.constant 1.000000e+00 : f32
    %109 = vector.broadcast %cst_26 : f32 to vector<1x16xf32>
    %110 = arith.addf %109, %108 : vector<1x16xf32>
    %111 = arith.divf %109, %110 : vector<1x16xf32>
    %112 = math.tanh %106 : vector<1x16xf32>
    %113 = vector.extract_strided_slice %111 {offsets = [0, 0], sizes = [1, 4], strides = [1, 1]} : vector<1x16xf32> to vector<1x4xf32>
    %114 = vector.extract_strided_slice %111 {offsets = [0, 4], sizes = [1, 4], strides = [1, 1]} : vector<1x16xf32> to vector<1x4xf32>
    %115 = vector.extract_strided_slice %112 {offsets = [0, 8], sizes = [1, 4], strides = [1, 1]} : vector<1x16xf32> to vector<1x4xf32>
    %116 = vector.extract_strided_slice %111 {offsets = [0, 12], sizes = [1, 4], strides = [1, 1]} : vector<1x16xf32> to vector<1x4xf32>
    %117 = arith.mulf %114, %100 : vector<1x4xf32>
    %118 = arith.mulf %113, %115 : vector<1x4xf32>
    %119 = arith.addf %117, %118 : vector<1x4xf32>
    %120 = math.tanh %119 : vector<1x4xf32>
    %121 = arith.mulf %116, %120 : vector<1x4xf32>
    %c5 = arith.constant 5 : index
    %c0_27 = arith.constant 0 : index
    %122 = vector.load %arg7[%c5, %c0_27] : memref<8x4xf32, #tpu.memory_space<vmem>>, vector<1x4xf32>
    tpu.vector_store %arg7[%c5, %c0_27], %121 {strides = array<i32>} : memref<8x4xf32, #tpu.memory_space<vmem>>, vector<1x4xf32>,
    %123 = vector.extract_strided_slice %6 {offsets = [6, 0], sizes = [1, 16], strides = [1, 1]} : vector<8x16xf32> to vector<1x16xf32>
    %cst_28 = arith.constant dense<0.000000e+00> : vector<1x16xf32>
    %124 = tpu.matmul %121, %2, %cst_28 {dimension_numbers = #tpu.dot_dimension_numbers<[1], [0], [0], [1], [0, 0, 1, 1], [], []>} : vector<1x4xf32>, vector<4x16xf32>, vector<1x16xf32> -> vector<1x16xf32>
    %125 = arith.addf %123, %124 : vector<1x16xf32>
    %126 = arith.negf %125 : vector<1x16xf32>
    %127 = math.exp %126 : vector<1x16xf32>
    %cst_29 = arith.constant 1.000000e+00 : f32
    %128 = vector.broadcast %cst_29 : f32 to vector<1x16xf32>
    %129 = arith.addf %128, %127 : vector<1x16xf32>
    %130 = arith.divf %128, %129 : vector<1x16xf32>
    %131 = math.tanh %125 : vector<1x16xf32>
    %132 = vector.extract_strided_slice %130 {offsets = [0, 0], sizes = [1, 4], strides = [1, 1]} : vector<1x16xf32> to vector<1x4xf32>
    %133 = vector.extract_strided_slice %130 {offsets = [0, 4], sizes = [1, 4], strides = [1, 1]} : vector<1x16xf32> to vector<1x4xf32>
    %134 = vector.extract_strided_slice %131 {offsets = [0, 8], sizes = [1, 4], strides = [1, 1]} : vector<1x16xf32> to vector<1x4xf32>
    %135 = vector.extract_strided_slice %130 {offsets = [0, 12], sizes = [1, 4], strides = [1, 1]} : vector<1x16xf32> to vector<1x4xf32>
    %136 = arith.mulf %133, %119 : vector<1x4xf32>
    %137 = arith.mulf %132, %134 : vector<1x4xf32>
    %138 = arith.addf %136, %137 : vector<1x4xf32>
    %139 = math.tanh %138 : vector<1x4xf32>
    %140 = arith.mulf %135, %139 : vector<1x4xf32>
    %c6 = arith.constant 6 : index
    %c0_30 = arith.constant 0 : index
    %141 = vector.load %arg7[%c6, %c0_30] : memref<8x4xf32, #tpu.memory_space<vmem>>, vector<1x4xf32>
    tpu.vector_store %arg7[%c6, %c0_30], %140 {strides = array<i32>} : memref<8x4xf32, #tpu.memory_space<vmem>>, vector<1x4xf32>,
    %142 = vector.extract_strided_slice %6 {offsets = [7, 0], sizes = [1, 16], strides = [1, 1]} : vector<8x16xf32> to vector<1x16xf32>
    %cst_31 = arith.constant dense<0.000000e+00> : vector<1x16xf32>
    %143 = tpu.matmul %140, %2, %cst_31 {dimension_numbers = #tpu.dot_dimension_numbers<[1], [0], [0], [1], [0, 0, 1, 1], [], []>} : vector<1x4xf32>, vector<4x16xf32>, vector<1x16xf32> -> vector<1x16xf32>
    %144 = arith.addf %142, %143 : vector<1x16xf32>
    %145 = arith.negf %144 : vector<1x16xf32>
    %146 = math.exp %145 : vector<1x16xf32>
    %cst_32 = arith.constant 1.000000e+00 : f32
    %147 = vector.broadcast %cst_32 : f32 to vector<1x16xf32>
    %148 = arith.addf %147, %146 : vector<1x16xf32>
    %149 = arith.divf %147, %148 : vector<1x16xf32>
    %150 = math.tanh %144 : vector<1x16xf32>
    %151 = vector.extract_strided_slice %149 {offsets = [0, 0], sizes = [1, 4], strides = [1, 1]} : vector<1x16xf32> to vector<1x4xf32>
    %152 = vector.extract_strided_slice %149 {offsets = [0, 4], sizes = [1, 4], strides = [1, 1]} : vector<1x16xf32> to vector<1x4xf32>
    %153 = vector.extract_strided_slice %150 {offsets = [0, 8], sizes = [1, 4], strides = [1, 1]} : vector<1x16xf32> to vector<1x4xf32>
    %154 = vector.extract_strided_slice %149 {offsets = [0, 12], sizes = [1, 4], strides = [1, 1]} : vector<1x16xf32> to vector<1x4xf32>
    %155 = arith.mulf %152, %138 : vector<1x4xf32>
    %156 = arith.mulf %151, %153 : vector<1x4xf32>
    %157 = arith.addf %155, %156 : vector<1x4xf32>
    %158 = math.tanh %157 : vector<1x4xf32>
    %159 = arith.mulf %154, %158 : vector<1x4xf32>
    %c7 = arith.constant 7 : index
    %c0_33 = arith.constant 0 : index
    %160 = vector.load %arg7[%c7, %c0_33] : memref<8x4xf32, #tpu.memory_space<vmem>>, vector<1x4xf32>
    tpu.vector_store %arg7[%c7, %c0_33], %159 {strides = array<i32>} : memref<8x4xf32, #tpu.memory_space<vmem>>, vector<1x4xf32>,
    %c0_34 = arith.constant 0 : index
    %c0_35 = arith.constant 0 : index
    %161 = vector.load %arg7[%c0_34, %c0_35] : memref<8x4xf32, #tpu.memory_space<vmem>>, vector<8x4xf32>
    %c0_36 = arith.constant 0 : index
    %c0_37 = arith.constant 0 : index
    %162 = vector.load %arg4[%c0_36, %c0_37] : memref<4x5xf32, #tpu.memory_space<vmem>>, vector<4x5xf32>
    %cst_38 = arith.constant dense<0.000000e+00> : vector<8x5xf32>
    %163 = tpu.matmul %161, %162, %cst_38 {dimension_numbers = #tpu.dot_dimension_numbers<[1], [0], [0], [1], [0, 0, 1, 1], [], []>} : vector<8x4xf32>, vector<4x5xf32>, vector<8x5xf32> -> vector<8x5xf32>
    %c0_39 = arith.constant 0 : index
    %c0_40 = arith.constant 0 : index
    %164 = vector.load %arg5[%c0_39, %c0_40] : memref<1x5xf32, #tpu.memory_space<vmem>>, vector<1x5xf32>
    %165 = vector.broadcast %164 : vector<1x5xf32> to vector<8x5xf32>
    %166 = arith.addf %163, %165 : vector<8x5xf32>
    %c0_41 = arith.constant 0 : index
    %c0_42 = arith.constant 0 : index
    %167 = vector.load %arg6[%c0_41, %c0_42] : memref<8x5xf32, #tpu.memory_space<vmem>>, vector<8x5xf32>
    tpu.vector_store %arg6[%c0_41, %c0_42], %166 {strides = array<i32>} : memref<8x5xf32, #tpu.memory_space<vmem>>, vector<8x5xf32>,
    return
  }
}

</mosaic_0001>

<llo_original>
// kernel: tpu_custom_call.1
$region0: #{tpu_custom_call.1}
  #allocation0 [shape = 'u32[]', space=smem, size = 0x4, offset = 0x4, fixed_abs, tag = 'smem constant byte address 0x4 - core index']
  #allocation1 [shape = 'u32[144,128]{1,0:T(1,128)}', space=vmem, size = 0x12000, scoped, tag = 'internal scratch']
  #allocation2 [shape = 'f32[8,4]{1,0:T(8,128)}', space=vmem, size = 0x1000, scoped, tag = 'scratch operand']
  %s0 = inlined_call_operand.vmem [shape: f32[8,4], index: 0, kind: input, shape index: {}]
  %s1 = inlined_call_operand.vmem [shape: f32[4,16], index: 1, kind: input, shape index: {}]
  %s2 = inlined_call_operand.vmem [shape: f32[4,16], index: 2, kind: input, shape index: {}]
  %s3 = inlined_call_operand.vmem [shape: f32[1,16], index: 3, kind: input, shape index: {}]
  %s4 = inlined_call_operand.vmem [shape: f32[4,5], index: 4, kind: input, shape index: {}]
  %s5 = inlined_call_operand.vmem [shape: f32[1,5], index: 5, kind: input, shape index: {}]
  %s6 = inlined_call_operand.hbm [shape: f32[8,5], index: 6, kind: output, shape index: {}]
  %s7 = sld [smem:[#allocation0]]
  $region34: #{tpu_custom_call.1} parent=0
    _
  %s9 = ssub.s32 1, %s7
  %s10 = scalar_select 0, %s9, %s7
  $region1: #{tpu_custom_call.1} parent=0
    #allocation3 [shape = 'u8[4096]{0}', space=vmem, size = 0x1000, scoped, tag = 'output window, operand 0, single buffered']
    #allocation4 [shape = 's32[1]{0}', space=sflag, size = 0x4, scoped, tag = 'scoped memory for tpu_custom_call.1']
    %11 = vsyncpa [#allocation4], 0
    // Predicated region
    $region2: #{tpu_custom_call.1} parent=1 // pred_check
      _
    $region3: #{tpu_custom_call.1} parent=1 // pred_check_branch
      %13 = sbr.rel (0) target = $region5
    $region4: #{tpu_custom_call.1} parent=1 // pred_region
      _
    $region5: #{tpu_custom_call.1} parent=1 // pred_fallthru
      _
    // Predicated region
    $region6: #{tpu_custom_call.1} parent=1 // pred_check
      _
    $region7: #{tpu_custom_call.1} parent=1 // pred_check_branch
      %15 = sbr.rel (0) target = $region9
    $region8: #{tpu_custom_call.1} parent=1 // pred_region
      _
    $region9: #{tpu_custom_call.1} parent=1 // pred_fallthru
      _
    // Predicated region
    $region10: #{tpu_custom_call.1} parent=1 // pred_check
      _
    $region11: #{tpu_custom_call.1} parent=1 // pred_check_branch
      %17 = sbr.rel (0) target = $region13
    $region12: #{tpu_custom_call.1} parent=1 // pred_region
      _
    $region13: #{tpu_custom_call.1} parent=1 // pred_fallthru
      _
    // Predicated region
    $region14: #{tpu_custom_call.1} parent=1 // pred_check
      _
    $region15: #{tpu_custom_call.1} parent=1 // pred_check_branch
      %19 = sbr.rel (0) target = $region17
    $region16: #{tpu_custom_call.1} parent=1 // pred_region
      _
    $region17: #{tpu_custom_call.1} parent=1 // pred_fallthru
      _
    // Predicated region
    $region18: #{tpu_custom_call.1} parent=1 // pred_check
      _
    $region19: #{tpu_custom_call.1} parent=1 // pred_check_branch
      %21 = sbr.rel (0) target = $region21
    $region20: #{tpu_custom_call.1} parent=1 // pred_region
      _
    $region21: #{tpu_custom_call.1} parent=1 // pred_fallthru
      _
    // Predicated region
    $region22: #{tpu_custom_call.1} parent=1 // pred_check
      _
    $region23: #{tpu_custom_call.1} parent=1 // pred_check_branch
      %23 = sbr.rel (0) target = $region25
    $region24: #{tpu_custom_call.1} parent=1 // pred_region
      _
    $region25: #{tpu_custom_call.1} parent=1 // pred_fallthru
      _
    %v24 = vld [vmem:[%s0] sm:$0xff]
    %v25 = vld [vmem:[%s1] sm:$0xf]
    %v26 = vld [vmem:[%s2] sm:$0xf]
    %v27 = vld [vmem:[%s3] sm:$0x1]
    %v29 = vlaneseq
    %v30 = vshrl.u32 %v29, 7
    %v31 = vsub.s32 0, %v30
    %v32 = vrot.slane %v27, %v31
    %vm34 = vcmask 31744
    %v36 = vsel %vm34, %v24, 0
    %vm38 = vcmask 1043456
    %v40 = vsel %vm38, %v25, 0
    %42 = vmatprep.subr.mxu0 0.0
    %43 = vmatpush1.msra.mxu0 %v40
    %44 = vmatprep.subr.mxu0 0.0
    %45 = vmatpush1.msra.mxu0 0.0
    %46 = vmatprep.subr.mxu0 0.0
    %47 = vmatpush1.msra.mxu0 0.0
    %48 = vmatprep.subr.mxu0 0.0
    %49 = vmatpush1.msra.mxu0 0.0
    %50 = vmatprep.subr.mxu0 0.0
    %51 = vmatpush1.msra.mxu0 0.0
    %52 = vmatprep.subr.mxu0 0.0
    %53 = vmatpush1.msra.mxu0 0.0
    %54 = vmatprep.subr.mxu0 0.0
    %55 = vmatpush1.msra.mxu0 0.0
    %56 = vmatprep.subr.mxu0 0.0
    %57 = vmatpush1.msra.mxu0 0.0
    %58 = vmatprep.subr.mxu0 0.0
    %59 = vmatpush1.msra.mxu0 0.0
    %60 = vmatprep.subr.mxu0 0.0
    %61 = vmatpush1.msra.mxu0 0.0
    %62 = vmatprep.subr.mxu0 0.0
    %63 = vmatpush1.msra.mxu0 0.0
    %64 = vmatprep.subr.mxu0 0.0
    %65 = vmatpush1.msra.mxu0 0.0
    %66 = vmatprep.subr.mxu0 0.0
    %67 = vmatpush1.msra.mxu0 0.0
    %68 = vmatprep.subr.mxu0 0.0
    %69 = vmatpush1.msra.mxu0 0.0
    %70 = vmatprep.subr.mxu0 0.0
    %71 = vmatpush1.msra.mxu0 0.0
    %72 = vmatprep.subr.mxu0 0.0
    %73 = vmatpush1.msra.mxu0 0.0
    %74 = vmatprep.subr.mxu0 0.0
    %75 = vmatpush1.msra.mxu0 0.0
    %76 = vmatprep.subr.mxu0 0.0
    %77 = vmatpush1.msra.mxu0 0.0
    %78 = vmatprep.subr.mxu0 0.0
    %79 = vmatpush1.msra.mxu0 0.0
    %80 = vmatprep.subr.mxu0 0.0
    %81 = vmatpush1.msra.mxu0 0.0
    %82 = vmatprep.subr.mxu0 0.0
    %83 = vmatpush1.msra.mxu0 0.0
    %84 = vmatprep.subr.mxu0 0.0
    %85 = vmatpush1.msra.mxu0 0.0
    %86 = vmatprep.subr.mxu0 0.0
    %87 = vmatpush1.msra.mxu0 0.0
    %88 = vmatprep.subr.mxu0 0.0
    %89 = vmatpush1.msra.mxu0 0.0
    %90 = vmatprep.subr.mxu0 0.0
    %91 = vmatpush1.msra.mxu0 0.0
    %92 = vmatprep.subr.mxu0 0.0
    %93 = vmatpush1.msra.mxu0 0.0
    %94 = vmatprep.subr.mxu0 0.0
    %95 = vmatpush1.msra.mxu0 0.0
    %96 = vmatprep.subr.mxu0 0.0
    %97 = vmatpush1.msra.mxu0 0.0
    %98 = vmatprep.subr.mxu0 0.0
    %99 = vmatpush1.msra.mxu0 0.0
    %100 = vmatprep.subr.mxu0 0.0
    %101 = vmatpush1.msra.mxu0 0.0
    %102 = vmatprep.subr.mxu0 0.0
    %103 = vmatpush1.msra.mxu0 0.0
    %104 = vmatprep.subr.mxu0 0.0
    %105 = vmatpush1.msra.mxu0 0.0
    %106 = vmatprep.mubr.f32.mxu0 0.0
    %107 = vmatmul.mubr.f32.gmra.mrb[0].mxu0 %v36
    %v108 = vpop.f32.mrb[0].mxu0
    %v109 = vadd.f32 %v32, %v108
    %v110 = vpop.f32.mrb[0].mxu0
    %111 = vdwg.mxu0
    %v113 = vsel %vm34, 0.0, 0
    %v116 = vsel %vm38, %v26, 0
    %118 = vmatprep.subr.mxu0 0.0
    %119 = vmatpush1.msra.mxu0 %v116
    %120 = vmatprep.subr.mxu0 0.0
    %121 = vmatpush1.msra.mxu0 0.0
    %122 = vmatprep.subr.mxu0 0.0
    %123 = vmatpush1.msra.mxu0 0.0
    %124 = vmatprep.subr.mxu0 0.0
    %125 = vmatpush1.msra.mxu0 0.0
    %126 = vmatprep.subr.mxu0 0.0
    %127 = vmatpush1.msra.mxu0 0.0
    %128 = vmatprep.subr.mxu0 0.0
    %129 = vmatpush1.msra.mxu0 0.0
    %130 = vmatprep.subr.mxu0 0.0
    %131 = vmatpush1.msra.mxu0 0.0
    %132 = vmatprep.subr.mxu0 0.0
    %133 = vmatpush1.msra.mxu0 0.0
    %134 = vmatprep.subr.mxu0 0.0
    %135 = vmatpush1.msra.mxu0 0.0
    %136 = vmatprep.subr.mxu0 0.0
    %137 = vmatpush1.msra.mxu0 0.0
    %138 = vmatprep.subr.mxu0 0.0
    %139 = vmatpush1.msra.mxu0 0.0
    %140 = vmatprep.subr.mxu0 0.0
    %141 = vmatpush1.msra.mxu0 0.0
    %142 = vmatprep.subr.mxu0 0.0
    %143 = vmatpush1.msra.mxu0 0.0
    %144 = vmatprep.subr.mxu0 0.0
    %145 = vmatpush1.msra.mxu0 0.0
    %146 = vmatprep.subr.mxu0 0.0
    %147 = vmatpush1.msra.mxu0 0.0
    %148 = vmatprep.subr.mxu0 0.0
    %149 = vmatpush1.msra.mxu0 0.0
    %150 = vmatprep.subr.mxu0 0.0
    %151 = vmatpush1.msra.mxu0 0.0
    %152 = vmatprep.subr.mxu0 0.0
    %153 = vmatpush1.msra.mxu0 0.0
    %154 = vmatprep.subr.mxu0 0.0
    %155 = vmatpush1.msra.mxu0 0.0
    %156 = vmatprep.subr.mxu0 0.0
    %157 = vmatpush1.msra.mxu0 0.0
    %158 = vmatprep.subr.mxu0 0.0
    %159 = vmatpush1.msra.mxu0 0.0
    %160 = vmatprep.subr.mxu0 0.0
    %161 = vmatpush1.msra.mxu0 0.0
    %162 = vmatprep.subr.mxu0 0.0
    %163 = vmatpush1.msra.mxu0 0.0
    %164 = vmatprep.subr.mxu0 0.0
    %165 = vmatpush1.msra.mxu0 0.0
    %166 = vmatprep.subr.mxu0 0.0
    %167 = vmatpush1.msra.mxu0 0.0
    %168 = vmatprep.subr.mxu0 0.0
    %169 = vmatpush1.msra.mxu0 0.0
    %170 = vmatprep.subr.mxu0 0.0
    %171 = vmatpush1.msra.mxu0 0.0
    %172 = vmatprep.subr.mxu0 0.0
    %173 = vmatpush1.msra.mxu0 0.0
    %174 = vmatprep.subr.mxu0 0.0
    %175 = vmatpush1.msra.mxu0 0.0
    %176 = vmatprep.subr.mxu0 0.0
    %177 = vmatpush1.msra.mxu0 0.0
    %178 = vmatprep.subr.mxu0 0.0
    %179 = vmatpush1.msra.mxu0 0.0
    %180 = vmatprep.subr.mxu0 0.0
    %181 = vmatpush1.msra.mxu0 0.0
    %182 = vmatprep.mubr.f32.mxu0 0.0
    %183 = vmatmul.mubr.f32.gmra.mrb[0].mxu0 %v113
    %v184 = vpop.f32.mrb[0].mxu0
    %v185 = vadd.f32 0.0, %v184
    %v186 = vpop.f32.mrb[0].mxu0
    %187 = vdwg.mxu0
    %v188 = vadd.f32 %v109, %v185
    %v189 = vxor.u32 %v188, 2147483648
    %v190 = vmul.f32 %v189, 1.442695
    %v191 = vpow.pop %v190
    %v192 = vadd.f32 %v191, 1.0
    %v193 = vrcp.pop %v192
    %v194 = vmul.f32 1.0, %v193
    %v195 = vtanh.pop %v188
    %v196 = vmul.f32 %v194, 0.0
    %198 = vrot.lane.b32.xlu0 %v195, 120
    %v199 = vpop.permute.xlu0 %198
    %v201 = vmul.f32 %v194, %v199
    %203 = vrot.lane.b32.xlu0 %v201, 4
    %v204 = vpop.permute.xlu0 %203
    %v206 = vadd.f32 %v196, %v204
    %v207 = vtanh.pop %v206
    %209 = vrot.lane.b32.xlu0 %v207, 8
    %v210 = vpop.permute.xlu0 %209
    %v212 = vmul.f32 %v194, %v210
    %214 = vrot.lane.b32.xlu0 %v212, 116
    %v215 = vpop.permute.xlu0 %214
    %vm217 = vcmask 24576
    %218 = vst.msk [vmem:[#allocation2] sm:$0x1] %vm217, %v215
    %v219 = vsel %vm34, %v215, 0
    %221 = vmatprep.subr.mxu0 0.0
    %222 = vmatpush1.msra.mxu0 %v116
    %223 = vmatprep.subr.mxu0 0.0
    %224 = vmatpush1.msra.mxu0 0.0
    %225 = vmatprep.subr.mxu0 0.0
    %226 = vmatpush1.msra.mxu0 0.0
    %227 = vmatprep.subr.mxu0 0.0
    %228 = vmatpush1.msra.mxu0 0.0
    %229 = vmatprep.subr.mxu0 0.0
    %230 = vmatpush1.msra.mxu0 0.0
    %231 = vmatprep.subr.mxu0 0.0
    %232 = vmatpush1.msra.mxu0 0.0
    %233 = vmatprep.subr.mxu0 0.0
    %234 = vmatpush1.msra.mxu0 0.0
    %235 = vmatprep.subr.mxu0 0.0
    %236 = vmatpush1.msra.mxu0 0.0
    %237 = vmatprep.subr.mxu0 0.0
    %238 = vmatpush1.msra.mxu0 0.0
    %239 = vmatprep.subr.mxu0 0.0
    %240 = vmatpush1.msra.mxu0 0.0
    %241 = vmatprep.subr.mxu0 0.0
    %242 = vmatpush1.msra.mxu0 0.0
    %243 = vmatprep.subr.mxu0 0.0
    %244 = vmatpush1.msra.mxu0 0.0
    %245 = vmatprep.subr.mxu0 0.0
    %246 = vmatpush1.msra.mxu0 0.0
    %247 = vmatprep.subr.mxu0 0.0
    %248 = vmatpush1.msra.mxu0 0.0
    %249 = vmatprep.subr.mxu0 0.0
    %250 = vmatpush1.msra.mxu0 0.0
    %251 = vmatprep.subr.mxu0 0.0
    %252 = vmatpush1.msra.mxu0 0.0
    %253 = vmatprep.subr.mxu0 0.0
    %254 = vmatpush1.msra.mxu0 0.0
    %255 = vmatprep.subr.mxu0 0.0
    %256 = vmatpush1.msra.mxu0 0.0
    %257 = vmatprep.subr.mxu0 0.0
    %258 = vmatpush1.msra.mxu0 0.0
    %259 = vmatprep.subr.mxu0 0.0
    %260 = vmatpush1.msra.mxu0 0.0
    %261 = vmatprep.subr.mxu0 0.0
    %262 = vmatpush1.msra.mxu0 0.0
    %263 = vmatprep.subr.mxu0 0.0
    %264 = vmatpush1.msra.mxu0 0.0
    %265 = vmatprep.subr.mxu0 0.0
    %266 = vmatpush1.msra.mxu0 0.0
    %267 = vmatprep.subr.mxu0 0.0
    %268 = vmatpush1.msra.mxu0 0.0
    %269 = vmatprep.subr.mxu0 0.0
    %270 = vmatpush1.msra.mxu0 0.0
    %271 = vmatprep.subr.mxu0 0.0
    %272 = vmatpush1.msra.mxu0 0.0
    %273 = vmatprep.subr.mxu0 0.0
    %274 = vmatpush1.msra.mxu0 0.0
    %275 = vmatprep.subr.mxu0 0.0
    %276 = vmatpush1.msra.mxu0 0.0
    %277 = vmatprep.subr.mxu0 0.0
    %278 = vmatpush1.msra.mxu0 0.0
    %279 = vmatprep.subr.mxu0 0.0
    %280 = vmatpush1.msra.mxu0 0.0
    %281 = vmatprep.subr.mxu0 0.0
    %282 = vmatpush1.msra.mxu0 0.0
    %283 = vmatprep.subr.mxu0 0.0
    %284 = vmatpush1.msra.mxu0 0.0
    %285 = vmatprep.mubr.f32.mxu0 0.0
    %286 = vmatmul.mubr.f32.gmra.mrb[0].mxu0 %v219
    %v287 = vpop.f32.mrb[0].mxu0
    %v288 = vadd.f32 0.0, %v287
    %v289 = vpop.f32.mrb[0].mxu0
    %290 = vdwg.mxu0
    %v292 = vrot.slane %v288, 7
    %v294 = vadd.f32 %v109, %v292
    %v295 = vxor.u32 %v294, 2147483648
    %v296 = vmul.f32 %v295, 1.442695
    %v297 = vpow.pop %v296
    %v298 = vadd.f32 %v297, 1.0
    %v299 = vrcp.pop %v298
    %v300 = vmul.f32 1.0, %v299
    %v301 = vtanh.pop %v294
    %v303 = vrot.slane %v206, 7
    %v305 = vmul.f32 %v300, %v303
    %307 = vrot.lane.b32.xlu0 %v301, 120
    %v308 = vpop.permute.xlu0 %307
    %v310 = vmul.f32 %v300, %v308
    %312 = vrot.lane.b32.xlu0 %v310, 4
    %v313 = vpop.permute.xlu0 %312
    %v315 = vadd.f32 %v305, %v313
    %v316 = vtanh.pop %v315
    %318 = vrot.lane.b32.xlu0 %v316, 8
    %v319 = vpop.permute.xlu0 %318
    %v321 = vmul.f32 %v300, %v319
    %323 = vrot.lane.b32.xlu0 %v321, 116
    %v324 = vpop.permute.xlu0 %323
    %vm326 = vcmask 25601
    %327 = vst.msk [vmem:[#allocation2] sm:$0x2] %vm326, %v324
    %v328 = vrot.slane %v321, 1
    %329 = vrot.lane.b32.xlu0 %v328, 116
    %v330 = vpop.permute.xlu0 %329
    %v331 = vsel %vm34, %v330, 0
    %333 = vmatprep.subr.mxu0 0.0
    %334 = vmatpush1.msra.mxu0 %v116
    %335 = vmatprep.subr.mxu0 0.0
    %336 = vmatpush1.msra.mxu0 0.0
    %337 = vmatprep.subr.mxu0 0.0
    %338 = vmatpush1.msra.mxu0 0.0
    %339 = vmatprep.subr.mxu0 0.0
    %340 = vmatpush1.msra.mxu0 0.0
    %341 = vmatprep.subr.mxu0 0.0
    %342 = vmatpush1.msra.mxu0 0.0
    %343 = vmatprep.subr.mxu0 0.0
    %344 = vmatpush1.msra.mxu0 0.0
    %345 = vmatprep.subr.mxu0 0.0
    %346 = vmatpush1.msra.mxu0 0.0
    %347 = vmatprep.subr.mxu0 0.0
    %348 = vmatpush1.msra.mxu0 0.0
    %349 = vmatprep.subr.mxu0 0.0
    %350 = vmatpush1.msra.mxu0 0.0
    %351 = vmatprep.subr.mxu0 0.0
    %352 = vmatpush1.msra.mxu0 0.0
    %353 = vmatprep.subr.mxu0 0.0
    %354 = vmatpush1.msra.mxu0 0.0
    %355 = vmatprep.subr.mxu0 0.0
    %356 = vmatpush1.msra.mxu0 0.0
    %357 = vmatprep.subr.mxu0 0.0
    %358 = vmatpush1.msra.mxu0 0.0
    %359 = vmatprep.subr.mxu0 0.0
    %360 = vmatpush1.msra.mxu0 0.0
    %361 = vmatprep.subr.mxu0 0.0
    %362 = vmatpush1.msra.mxu0 0.0
    %363 = vmatprep.subr.mxu0 0.0
    %364 = vmatpush1.msra.mxu0 0.0
    %365 = vmatprep.subr.mxu0 0.0
    %366 = vmatpush1.msra.mxu0 0.0
    %367 = vmatprep.subr.mxu0 0.0
    %368 = vmatpush1.msra.mxu0 0.0
    %369 = vmatprep.subr.mxu0 0.0
    %370 = vmatpush1.msra.mxu0 0.0
    %371 = vmatprep.subr.mxu0 0.0
    %372 = vmatpush1.msra.mxu0 0.0
    %373 = vmatprep.subr.mxu0 0.0
    %374 = vmatpush1.msra.mxu0 0.0
    %375 = vmatprep.subr.mxu0 0.0
    %376 = vmatpush1.msra.mxu0 0.0
    %377 = vmatprep.subr.mxu0 0.0
    %378 = vmatpush1.msra.mxu0 0.0
    %379 = vmatprep.subr.mxu0 0.0
    %380 = vmatpush1.msra.mxu0 0.0
    %381 = vmatprep.subr.mxu0 0.0
    %382 = vmatpush1.msra.mxu0 0.0
    %383 = vmatprep.subr.mxu0 0.0
    %384 = vmatpush1.msra.mxu0 0.0
    %385 = vmatprep.subr.mxu0 0.0
    %386 = vmatpush1.msra.mxu0 0.0
    %387 = vmatprep.subr.mxu0 0.0
    %388 = vmatpush1.msra.mxu0 0.0
    %389 = vmatprep.subr.mxu0 0.0
    %390 = vmatpush1.msra.mxu0 0.0
    %391 = vmatprep.subr.mxu0 0.0
    %392 = vmatpush1.msra.mxu0 0.0
    %393 = vmatprep.subr.mxu0 0.0
    %394 = vmatpush1.msra.mxu0 0.0
    %395 = vmatprep.subr.mxu0 0.0
    %396 = vmatpush1.msra.mxu0 0.0
    %397 = vmatprep.mubr.f32.mxu0 0.0
    %398 = vmatmul.mubr.f32.gmra.mrb[0].mxu0 %v331
    %v399 = vpop.f32.mrb[0].mxu0
    %v400 = vadd.f32 0.0, %v399
    %v401 = vpop.f32.mrb[0].mxu0
    %402 = vdwg.mxu0
    %v404 = vrot.slane %v400, 6
    %v406 = vadd.f32 %v109, %v404
    %v407 = vxor.u32 %v406, 2147483648
    %v408 = vmul.f32 %v407, 1.442695
    %v409 = vpow.pop %v408
    %v410 = vadd.f32 %v409, 1.0
    %v411 = vrcp.pop %v410
    %v412 = vmul.f32 1.0, %v411
    %v413 = vtanh.pop %v406
    %v415 = vrot.slane %v315, 7
    %v417 = vmul.f32 %v412, %v415
    %419 = vrot.lane.b32.xlu0 %v413, 120
    %v420 = vpop.permute.xlu0 %419
    %v422 = vmul.f32 %v412, %v420
    %424 = vrot.lane.b32.xlu0 %v422, 4
    %v425 = vpop.permute.xlu0 %424
    %v427 = vadd.f32 %v417, %v425
    %v428 = vtanh.pop %v427
    %430 = vrot.lane.b32.xlu0 %v428, 8
    %v431 = vpop.permute.xlu0 %430
    %v433 = vmul.f32 %v412, %v431
    %435 = vrot.lane.b32.xlu0 %v433, 116
    %v436 = vpop.permute.xlu0 %435
    %vm438 = vcmask 26626
    %439 = vst.msk [vmem:[#allocation2] sm:$0x4] %vm438, %v436
    %v440 = vrot.slane %v433, 2
    %441 = vrot.lane.b32.xlu0 %v440, 116
    %v442 = vpop.permute.xlu0 %441
    %v443 = vsel %vm34, %v442, 0
    %445 = vmatprep.subr.mxu0 0.0
    %446 = vmatpush1.msra.mxu0 %v116
    %447 = vmatprep.subr.mxu0 0.0
    %448 = vmatpush1.msra.mxu0 0.0
    %449 = vmatprep.subr.mxu0 0.0
    %450 = vmatpush1.msra.mxu0 0.0
    %451 = vmatprep.subr.mxu0 0.0
    %452 = vmatpush1.msra.mxu0 0.0
    %453 = vmatprep.subr.mxu0 0.0
    %454 = vmatpush1.msra.mxu0 0.0
    %455 = vmatprep.subr.mxu0 0.0
    %456 = vmatpush1.msra.mxu0 0.0
    %457 = vmatprep.subr.mxu0 0.0
    %458 = vmatpush1.msra.mxu0 0.0
    %459 = vmatprep.subr.mxu0 0.0
    %460 = vmatpush1.msra.mxu0 0.0
    %461 = vmatprep.subr.mxu0 0.0
    %462 = vmatpush1.msra.mxu0 0.0
    %463 = vmatprep.subr.mxu0 0.0
    %464 = vmatpush1.msra.mxu0 0.0
    %465 = vmatprep.subr.mxu0 0.0
    %466 = vmatpush1.msra.mxu0 0.0
    %467 = vmatprep.subr.mxu0 0.0
    %468 = vmatpush1.msra.mxu0 0.0
    %469 = vmatprep.subr.mxu0 0.0
    %470 = vmatpush1.msra.mxu0 0.0
    %471 = vmatprep.subr.mxu0 0.0
    %472 = vmatpush1.msra.mxu0 0.0
    %473 = vmatprep.subr.mxu0 0.0
    %474 = vmatpush1.msra.mxu0 0.0
    %475 = vmatprep.subr.mxu0 0.0
    %476 = vmatpush1.msra.mxu0 0.0
    %477 = vmatprep.subr.mxu0 0.0
    %478 = vmatpush1.msra.mxu0 0.0
    %479 = vmatprep.subr.mxu0 0.0
    %480 = vmatpush1.msra.mxu0 0.0
    %481 = vmatprep.subr.mxu0 0.0
    %482 = vmatpush1.msra.mxu0 0.0
    %483 = vmatprep.subr.mxu0 0.0
    %484 = vmatpush1.msra.mxu0 0.0
    %485 = vmatprep.subr.mxu0 0.0
    %486 = vmatpush1.msra.mxu0 0.0
    %487 = vmatprep.subr.mxu0 0.0
    %488 = vmatpush1.msra.mxu0 0.0
    %489 = vmatprep.subr.mxu0 0.0
    %490 = vmatpush1.msra.mxu0 0.0
    %491 = vmatprep.subr.mxu0 0.0
    %492 = vmatpush1.msra.mxu0 0.0
    %493 = vmatprep.subr.mxu0 0.0
    %494 = vmatpush1.msra.mxu0 0.0
    %495 = vmatprep.subr.mxu0 0.0
    %496 = vmatpush1.msra.mxu0 0.0
    %497 = vmatprep.subr.mxu0 0.0
    %498 = vmatpush1.msra.mxu0 0.0
    %499 = vmatprep.subr.mxu0 0.0
    %500 = vmatpush1.msra.mxu0 0.0
    %501 = vmatprep.subr.mxu0 0.0
    %502 = vmatpush1.msra.mxu0 0.0
    %503 = vmatprep.subr.mxu0 0.0
    %504 = vmatpush1.msra.mxu0 0.0
    %505 = vmatprep.subr.mxu0 0.0
    %506 = vmatpush1.msra.mxu0 0.0
    %507 = vmatprep.subr.mxu0 0.0
    %508 = vmatpush1.msra.mxu0 0.0
    %509 = vmatprep.mubr.f32.mxu0 0.0
    %510 = vmatmul.mubr.f32.gmra.mrb[0].mxu0 %v443
    %v511 = vpop.f32.mrb[0].mxu0
    %v512 = vadd.f32 0.0, %v511
    %v513 = vpop.f32.mrb[0].mxu0
    %514 = vdwg.mxu0
    %v516 = vrot.slane %v512, 5
    %v518 = vadd.f32 %v109, %v516
    %v519 = vxor.u32 %v518, 2147483648
    %v520 = vmul.f32 %v519, 1.442695
    %v521 = vpow.pop %v520
    %v522 = vadd.f32 %v521, 1.0
    %v523 = vrcp.pop %v522
    %v524 = vmul.f32 1.0, %v523
    %v525 = vtanh.pop %v518
    %v527 = vrot.slane %v427, 7
    %v529 = vmul.f32 %v524, %v527
    %531 = vrot.lane.b32.xlu0 %v525, 120
    %v532 = vpop.permute.xlu0 %531
    %v534 = vmul.f32 %v524, %v532
    %536 = vrot.lane.b32.xlu0 %v534, 4
    %v537 = vpop.permute.xlu0 %536
    %v539 = vadd.f32 %v529, %v537
    %v540 = vtanh.pop %v539
    %542 = vrot.lane.b32.xlu0 %v540, 8
    %v543 = vpop.permute.xlu0 %542
    %v545 = vmul.f32 %v524, %v543
    %547 = vrot.lane.b32.xlu0 %v545, 116
    %v548 = vpop.permute.xlu0 %547
    %vm550 = vcmask 27651
    %551 = vst.msk [vmem:[#allocation2] sm:$0x8] %vm550, %v548
    %v552 = vrot.slane %v545, 3
    %553 = vrot.lane.b32.xlu0 %v552, 116
    %v554 = vpop.permute.xlu0 %553
    %v555 = vsel %vm34, %v554, 0
    %557 = vmatprep.subr.mxu0 0.0
    %558 = vmatpush1.msra.mxu0 %v116
    %559 = vmatprep.subr.mxu0 0.0
    %560 = vmatpush1.msra.mxu0 0.0
    %561 = vmatprep.subr.mxu0 0.0
    %562 = vmatpush1.msra.mxu0 0.0
    %563 = vmatprep.subr.mxu0 0.0
    %564 = vmatpush1.msra.mxu0 0.0
    %565 = vmatprep.subr.mxu0 0.0
    %566 = vmatpush1.msra.mxu0 0.0
    %567 = vmatprep.subr.mxu0 0.0
    %568 = vmatpush1.msra.mxu0 0.0
    %569 = vmatprep.subr.mxu0 0.0
    %570 = vmatpush1.msra.mxu0 0.0
    %571 = vmatprep.subr.mxu0 0.0
    %572 = vmatpush1.msra.mxu0 0.0
    %573 = vmatprep.subr.mxu0 0.0
    %574 = vmatpush1.msra.mxu0 0.0
    %575 = vmatprep.subr.mxu0 0.0
    %576 = vmatpush1.msra.mxu0 0.0
    %577 = vmatprep.subr.mxu0 0.0
    %578 = vmatpush1.msra.mxu0 0.0
    %579 = vmatprep.subr.mxu0 0.0
    %580 = vmatpush1.msra.mxu0 0.0
    %581 = vmatprep.subr.mxu0 0.0
    %582 = vmatpush1.msra.mxu0 0.0
    %583 = vmatprep.subr.mxu0 0.0
    %584 = vmatpush1.msra.mxu0 0.0
    %585 = vmatprep.subr.mxu0 0.0
    %586 = vmatpush1.msra.mxu0 0.0
    %587 = vmatprep.subr.mxu0 0.0
    %588 = vmatpush1.msra.mxu0 0.0
    %589 = vmatprep.subr.mxu0 0.0
    %590 = vmatpush1.msra.mxu0 0.0
    %591 = vmatprep.subr.mxu0 0.0
    %592 = vmatpush1.msra.mxu0 0.0
    %593 = vmatprep.subr.mxu0 0.0
    %594 = vmatpush1.msra.mxu0 0.0
    %595 = vmatprep.subr.mxu0 0.0
    %596 = vmatpush1.msra.mxu0 0.0
    %597 = vmatprep.subr.mxu0 0.0
    %598 = vmatpush1.msra.mxu0 0.0
    %599 = vmatprep.subr.mxu0 0.0
    %600 = vmatpush1.msra.mxu0 0.0
    %601 = vmatprep.subr.mxu0 0.0
    %602 = vmatpush1.msra.mxu0 0.0
    %603 = vmatprep.subr.mxu0 0.0
    %604 = vmatpush1.msra.mxu0 0.0
    %605 = vmatprep.subr.mxu0 0.0
    %606 = vmatpush1.msra.mxu0 0.0
    %607 = vmatprep.subr.mxu0 0.0
    %608 = vmatpush1.msra.mxu0 0.0
    %609 = vmatprep.subr.mxu0 0.0
    %610 = vmatpush1.msra.mxu0 0.0
    %611 = vmatprep.subr.mxu0 0.0
    %612 = vmatpush1.msra.mxu0 0.0
    %613 = vmatprep.subr.mxu0 0.0
    %614 = vmatpush1.msra.mxu0 0.0
    %615 = vmatprep.subr.mxu0 0.0
    %616 = vmatpush1.msra.mxu0 0.0
    %617 = vmatprep.subr.mxu0 0.0
    %618 = vmatpush1.msra.mxu0 0.0
    %619 = vmatprep.subr.mxu0 0.0
    %620 = vmatpush1.msra.mxu0 0.0
    %621 = vmatprep.mubr.f32.mxu0 0.0
    %622 = vmatmul.mubr.f32.gmra.mrb[0].mxu0 %v555
    %v623 = vpop.f32.mrb[0].mxu0
    %v624 = vadd.f32 0.0, %v623
    %v625 = vpop.f32.mrb[0].mxu0
    %626 = vdwg.mxu0
    %v628 = vrot.slane %v624, 4
    %v630 = vadd.f32 %v109, %v628
    %v631 = vxor.u32 %v630, 2147483648
    %v632 = vmul.f32 %v631, 1.442695
    %v633 = vpow.pop %v632
    %v634 = vadd.f32 %v633, 1.0
    %v635 = vrcp.pop %v634
    %v636 = vmul.f32 1.0, %v635
    %v637 = vtanh.pop %v630
    %v639 = vrot.slane %v539, 7
    %v641 = vmul.f32 %v636, %v639
    %643 = vrot.lane.b32.xlu0 %v637, 120
    %v644 = vpop.permute.xlu0 %643
    %v646 = vmul.f32 %v636, %v644
    %648 = vrot.lane.b32.xlu0 %v646, 4
    %v649 = vpop.permute.xlu0 %648
    %v651 = vadd.f32 %v641, %v649
    %v652 = vtanh.pop %v651
    %654 = vrot.lane.b32.xlu0 %v652, 8
    %v655 = vpop.permute.xlu0 %654
    %v657 = vmul.f32 %v636, %v655
    %659 = vrot.lane.b32.xlu0 %v657, 116
    %v660 = vpop.permute.xlu0 %659
    %vm662 = vcmask 28676
    %663 = vst.msk [vmem:[#allocation2] sm:$0x10] %vm662, %v660
    %v664 = vrot.slane %v657, 4
    %665 = vrot.lane.b32.xlu0 %v664, 116
    %v666 = vpop.permute.xlu0 %665
    %v667 = vsel %vm34, %v666, 0
    %669 = vmatprep.subr.mxu0 0.0
    %670 = vmatpush1.msra.mxu0 %v116
    %671 = vmatprep.subr.mxu0 0.0
    %672 = vmatpush1.msra.mxu0 0.0
    %673 = vmatprep.subr.mxu0 0.0
    %674 = vmatpush1.msra.mxu0 0.0
    %675 = vmatprep.subr.mxu0 0.0
    %676 = vmatpush1.msra.mxu0 0.0
    %677 = vmatprep.subr.mxu0 0.0
    %678 = vmatpush1.msra.mxu0 0.0
    %679 = vmatprep.subr.mxu0 0.0
    %680 = vmatpush1.msra.mxu0 0.0
    %681 = vmatprep.subr.mxu0 0.0
    %682 = vmatpush1.msra.mxu0 0.0
    %683 = vmatprep.subr.mxu0 0.0
    %684 = vmatpush1.msra.mxu0 0.0
    %685 = vmatprep.subr.mxu0 0.0
    %686 = vmatpush1.msra.mxu0 0.0
    %687 = vmatprep.subr.mxu0 0.0
    %688 = vmatpush1.msra.mxu0 0.0
    %689 = vmatprep.subr.mxu0 0.0
    %690 = vmatpush1.msra.mxu0 0.0
    %691 = vmatprep.subr.mxu0 0.0
    %692 = vmatpush1.msra.mxu0 0.0
    %693 = vmatprep.subr.mxu0 0.0
    %694 = vmatpush1.msra.mxu0 0.0
    %695 = vmatprep.subr.mxu0 0.0
    %696 = vmatpush1.msra.mxu0 0.0
    %697 = vmatprep.subr.mxu0 0.0
    %698 = vmatpush1.msra.mxu0 0.0
    %699 = vmatprep.subr.mxu0 0.0
    %700 = vmatpush1.msra.mxu0 0.0
    %701 = vmatprep.subr.mxu0 0.0
    %702 = vmatpush1.msra.mxu0 0.0
    %703 = vmatprep.subr.mxu0 0.0
    %704 = vmatpush1.msra.mxu0 0.0
    %705 = vmatprep.subr.mxu0 0.0
    %706 = vmatpush1.msra.mxu0 0.0
    %707 = vmatprep.subr.mxu0 0.0
    %708 = vmatpush1.msra.mxu0 0.0
    %709 = vmatprep.subr.mxu0 0.0
    %710 = vmatpush1.msra.mxu0 0.0
    %711 = vmatprep.subr.mxu0 0.0
    %712 = vmatpush1.msra.mxu0 0.0
    %713 = vmatprep.subr.mxu0 0.0
    %714 = vmatpush1.msra.mxu0 0.0
    %715 = vmatprep.subr.mxu0 0.0
    %716 = vmatpush1.msra.mxu0 0.0
    %717 = vmatprep.subr.mxu0 0.0
    %718 = vmatpush1.msra.mxu0 0.0
    %719 = vmatprep.subr.mxu0 0.0
    %720 = vmatpush1.msra.mxu0 0.0
    %721 = vmatprep.subr.mxu0 0.0
    %722 = vmatpush1.msra.mxu0 0.0
    %723 = vmatprep.subr.mxu0 0.0
    %724 = vmatpush1.msra.mxu0 0.0
    %725 = vmatprep.subr.mxu0 0.0
    %726 = vmatpush1.msra.mxu0 0.0
    %727 = vmatprep.subr.mxu0 0.0
    %728 = vmatpush1.msra.mxu0 0.0
    %729 = vmatprep.subr.mxu0 0.0
    %730 = vmatpush1.msra.mxu0 0.0
    %731 = vmatprep.subr.mxu0 0.0
    %732 = vmatpush1.msra.mxu0 0.0
    %733 = vmatprep.mubr.f32.mxu0 0.0
    %734 = vmatmul.mubr.f32.gmra.mrb[0].mxu0 %v667
    %v735 = vpop.f32.mrb[0].mxu0
    %v736 = vadd.f32 0.0, %v735
    %v737 = vpop.f32.mrb[0].mxu0
    %738 = vdwg.mxu0
    %v740 = vrot.slane %v736, 3
    %v742 = vadd.f32 %v109, %v740
    %v743 = vxor.u32 %v742, 2147483648
    %v744 = vmul.f32 %v743, 1.442695
    %v745 = vpow.pop %v744
    %v746 = vadd.f32 %v745, 1.0
    %v747 = vrcp.pop %v746
    %v748 = vmul.f32 1.0, %v747
    %v749 = vtanh.pop %v742
    %v751 = vrot.slane %v651, 7
    %v753 = vmul.f32 %v748, %v751
    %755 = vrot.lane.b32.xlu0 %v749, 120
    %v756 = vpop.permute.xlu0 %755
    %v758 = vmul.f32 %v748, %v756
    %760 = vrot.lane.b32.xlu0 %v758, 4
    %v761 = vpop.permute.xlu0 %760
    %v763 = vadd.f32 %v753, %v761
    %v764 = vtanh.pop %v763
    %766 = vrot.lane.b32.xlu0 %v764, 8
    %v767 = vpop.permute.xlu0 %766
    %v769 = vmul.f32 %v748, %v767
    %771 = vrot.lane.b32.xlu0 %v769, 116
    %v772 = vpop.permute.xlu0 %771
    %vm774 = vcmask 29701
    %775 = vst.msk [vmem:[#allocation2] sm:$0x20] %vm774, %v772
    %v776 = vrot.slane %v769, 5
    %777 = vrot.lane.b32.xlu0 %v776, 116
    %v778 = vpop.permute.xlu0 %777
    %v779 = vsel %vm34, %v778, 0
    %781 = vmatprep.subr.mxu0 0.0
    %782 = vmatpush1.msra.mxu0 %v116
    %783 = vmatprep.subr.mxu0 0.0
    %784 = vmatpush1.msra.mxu0 0.0
    %785 = vmatprep.subr.mxu0 0.0
    %786 = vmatpush1.msra.mxu0 0.0
    %787 = vmatprep.subr.mxu0 0.0
    %788 = vmatpush1.msra.mxu0 0.0
    %789 = vmatprep.subr.mxu0 0.0
    %790 = vmatpush1.msra.mxu0 0.0
    %791 = vmatprep.subr.mxu0 0.0
    %792 = vmatpush1.msra.mxu0 0.0
    %793 = vmatprep.subr.mxu0 0.0
    %794 = vmatpush1.msra.mxu0 0.0
    %795 = vmatprep.subr.mxu0 0.0
    %796 = vmatpush1.msra.mxu0 0.0
    %797 = vmatprep.subr.mxu0 0.0
    %798 = vmatpush1.msra.mxu0 0.0
    %799 = vmatprep.subr.mxu0 0.0
    %800 = vmatpush1.msra.mxu0 0.0
    %801 = vmatprep.subr.mxu0 0.0
    %802 = vmatpush1.msra.mxu0 0.0
    %803 = vmatprep.subr.mxu0 0.0
    %804 = vmatpush1.msra.mxu0 0.0
    %805 = vmatprep.subr.mxu0 0.0
    %806 = vmatpush1.msra.mxu0 0.0
    %807 = vmatprep.subr.mxu0 0.0
    %808 = vmatpush1.msra.mxu0 0.0
    %809 = vmatprep.subr.mxu0 0.0
    %810 = vmatpush1.msra.mxu0 0.0
    %811 = vmatprep.subr.mxu0 0.0
    %812 = vmatpush1.msra.mxu0 0.0
    %813 = vmatprep.subr.mxu0 0.0
    %814 = vmatpush1.msra.mxu0 0.0
    %815 = vmatprep.subr.mxu0 0.0
    %816 = vmatpush1.msra.mxu0 0.0
    %817 = vmatprep.subr.mxu0 0.0
    %818 = vmatpush1.msra.mxu0 0.0
    %819 = vmatprep.subr.mxu0 0.0
    %820 = vmatpush1.msra.mxu0 0.0
    %821 = vmatprep.subr.mxu0 0.0
    %822 = vmatpush1.msra.mxu0 0.0
    %823 = vmatprep.subr.mxu0 0.0
    %824 = vmatpush1.msra.mxu0 0.0
    %825 = vmatprep.subr.mxu0 0.0
    %826 = vmatpush1.msra.mxu0 0.0
    %827 = vmatprep.subr.mxu0 0.0
    %828 = vmatpush1.msra.mxu0 0.0
    %829 = vmatprep.subr.mxu0 0.0
    %830 = vmatpush1.msra.mxu0 0.0
    %831 = vmatprep.subr.mxu0 0.0
    %832 = vmatpush1.msra.mxu0 0.0
    %833 = vmatprep.subr.mxu0 0.0
    %834 = vmatpush1.msra.mxu0 0.0
    %835 = vmatprep.subr.mxu0 0.0
    %836 = vmatpush1.msra.mxu0 0.0
    %837 = vmatprep.subr.mxu0 0.0
    %838 = vmatpush1.msra.mxu0 0.0
    %839 = vmatprep.subr.mxu0 0.0
    %840 = vmatpush1.msra.mxu0 0.0
    %841 = vmatprep.subr.mxu0 0.0
    %842 = vmatpush1.msra.mxu0 0.0
    %843 = vmatprep.subr.mxu0 0.0
    %844 = vmatpush1.msra.mxu0 0.0
    %845 = vmatprep.mubr.f32.mxu0 0.0
    %846 = vmatmul.mubr.f32.gmra.mrb[0].mxu0 %v779
    %v847 = vpop.f32.mrb[0].mxu0
    %v848 = vadd.f32 0.0, %v847
    %v849 = vpop.f32.mrb[0].mxu0
    %850 = vdwg.mxu0
    %v852 = vrot.slane %v848, 2
    %v854 = vadd.f32 %v109, %v852
    %v855 = vxor.u32 %v854, 2147483648
    %v856 = vmul.f32 %v855, 1.442695
    %v857 = vpow.pop %v856
    %v858 = vadd.f32 %v857, 1.0
    %v859 = vrcp.pop %v858
    %v860 = vmul.f32 1.0, %v859
    %v861 = vtanh.pop %v854
    %v863 = vrot.slane %v763, 7
    %v865 = vmul.f32 %v860, %v863
    %867 = vrot.lane.b32.xlu0 %v861, 120
    %v868 = vpop.permute.xlu0 %867
    %v870 = vmul.f32 %v860, %v868
    %872 = vrot.lane.b32.xlu0 %v870, 4
    %v873 = vpop.permute.xlu0 %872
    %v875 = vadd.f32 %v865, %v873
    %v876 = vtanh.pop %v875
    %878 = vrot.lane.b32.xlu0 %v876, 8
    %v879 = vpop.permute.xlu0 %878
    %v881 = vmul.f32 %v860, %v879
    %883 = vrot.lane.b32.xlu0 %v881, 116
    %v884 = vpop.permute.xlu0 %883
    %vm886 = vcmask 30726
    %887 = vst.msk [vmem:[#allocation2] sm:$0x40] %vm886, %v884
    %v888 = vrot.slane %v881, 6
    %889 = vrot.lane.b32.xlu0 %v888, 116
    %v890 = vpop.permute.xlu0 %889
    %v891 = vsel %vm34, %v890, 0
    %893 = vmatprep.subr.mxu0 0.0
    %894 = vmatpush1.msra.mxu0 %v116
    %895 = vmatprep.subr.mxu0 0.0
    %896 = vmatpush1.msra.mxu0 0.0
    %897 = vmatprep.subr.mxu0 0.0
    %898 = vmatpush1.msra.mxu0 0.0
    %899 = vmatprep.subr.mxu0 0.0
    %900 = vmatpush1.msra.mxu0 0.0
    %901 = vmatprep.subr.mxu0 0.0
    %902 = vmatpush1.msra.mxu0 0.0
    %903 = vmatprep.subr.mxu0 0.0
    %904 = vmatpush1.msra.mxu0 0.0
    %905 = vmatprep.subr.mxu0 0.0
    %906 = vmatpush1.msra.mxu0 0.0
    %907 = vmatprep.subr.mxu0 0.0
    %908 = vmatpush1.msra.mxu0 0.0
    %909 = vmatprep.subr.mxu0 0.0
    %910 = vmatpush1.msra.mxu0 0.0
    %911 = vmatprep.subr.mxu0 0.0
    %912 = vmatpush1.msra.mxu0 0.0
    %913 = vmatprep.subr.mxu0 0.0
    %914 = vmatpush1.msra.mxu0 0.0
    %915 = vmatprep.subr.mxu0 0.0
    %916 = vmatpush1.msra.mxu0 0.0
    %917 = vmatprep.subr.mxu0 0.0
    %918 = vmatpush1.msra.mxu0 0.0
    %919 = vmatprep.subr.mxu0 0.0
    %920 = vmatpush1.msra.mxu0 0.0
    %921 = vmatprep.subr.mxu0 0.0
    %922 = vmatpush1.msra.mxu0 0.0
    %923 = vmatprep.subr.mxu0 0.0
    %924 = vmatpush1.msra.mxu0 0.0
    %925 = vmatprep.subr.mxu0 0.0
    %926 = vmatpush1.msra.mxu0 0.0
    %927 = vmatprep.subr.mxu0 0.0
    %928 = vmatpush1.msra.mxu0 0.0
    %929 = vmatprep.subr.mxu0 0.0
    %930 = vmatpush1.msra.mxu0 0.0
    %931 = vmatprep.subr.mxu0 0.0
    %932 = vmatpush1.msra.mxu0 0.0
    %933 = vmatprep.subr.mxu0 0.0
    %934 = vmatpush1.msra.mxu0 0.0
    %935 = vmatprep.subr.mxu0 0.0
    %936 = vmatpush1.msra.mxu0 0.0
    %937 = vmatprep.subr.mxu0 0.0
    %938 = vmatpush1.msra.mxu0 0.0
    %939 = vmatprep.subr.mxu0 0.0
    %940 = vmatpush1.msra.mxu0 0.0
    %941 = vmatprep.subr.mxu0 0.0
    %942 = vmatpush1.msra.mxu0 0.0
    %943 = vmatprep.subr.mxu0 0.0
    %944 = vmatpush1.msra.mxu0 0.0
    %945 = vmatprep.subr.mxu0 0.0
    %946 = vmatpush1.msra.mxu0 0.0
    %947 = vmatprep.subr.mxu0 0.0
    %948 = vmatpush1.msra.mxu0 0.0
    %949 = vmatprep.subr.mxu0 0.0
    %950 = vmatpush1.msra.mxu0 0.0
    %951 = vmatprep.subr.mxu0 0.0
    %952 = vmatpush1.msra.mxu0 0.0
    %953 = vmatprep.subr.mxu0 0.0
    %954 = vmatpush1.msra.mxu0 0.0
    %955 = vmatprep.subr.mxu0 0.0
    %956 = vmatpush1.msra.mxu0 0.0
    %957 = vmatprep.mubr.f32.mxu0 0.0
    %958 = vmatmul.mubr.f32.gmra.mrb[0].mxu0 %v891
    %v959 = vpop.f32.mrb[0].mxu0
    %v960 = vadd.f32 0.0, %v959
    %v961 = vpop.f32.mrb[0].mxu0
    %962 = vdwg.mxu0
    %v964 = vrot.slane %v960, 1
    %v966 = vadd.f32 %v109, %v964
    %v967 = vxor.u32 %v966, 2147483648
    %v968 = vmul.f32 %v967, 1.442695
    %v969 = vpow.pop %v968
    %v970 = vadd.f32 %v969, 1.0
    %v971 = vrcp.pop %v970
    %v972 = vmul.f32 1.0, %v971
    %v973 = vtanh.pop %v966
    %v975 = vrot.slane %v875, 7
    %v977 = vmul.f32 %v972, %v975
    %979 = vrot.lane.b32.xlu0 %v973, 120
    %v980 = vpop.permute.xlu0 %979
    %v982 = vmul.f32 %v972, %v980
    %984 = vrot.lane.b32.xlu0 %v982, 4
    %v985 = vpop.permute.xlu0 %984
    %v987 = vadd.f32 %v977, %v985
    %v988 = vtanh.pop %v987
    %990 = vrot.lane.b32.xlu0 %v988, 8
    %v991 = vpop.permute.xlu0 %990
    %v993 = vmul.f32 %v972, %v991
    %995 = vrot.lane.b32.xlu0 %v993, 116
    %v996 = vpop.permute.xlu0 %995
    %vm998 = vcmask 31751
    %999 = vst.msk [vmem:[#allocation2] sm:$0x80] %vm998, %v996
    %v1000 = vld [vmem:[#allocation2] sm:$0xff]
    %v1001 = vld [vmem:[%s4] sm:$0xf]
    %v1002 = vld [vmem:[%s5] sm:$0x1]
    %v1004 = vlaneseq
    %v1005 = vshrl.u32 %v1004, 7
    %v1006 = vsub.s32 0, %v1005
    %v1007 = vrot.slane %v1002, %v1006
    %v1010 = vsel %vm34, %v1000, 0
    %v1013 = vsel %vm38, %v1001, 0
    %1015 = vmatprep.subr.mxu0 0.0
    %1016 = vmatpush1.msra.mxu0 %v1013
    %1017 = vmatprep.subr.mxu0 0.0
    %1018 = vmatpush1.msra.mxu0 0.0
    %1019 = vmatprep.subr.mxu0 0.0
    %1020 = vmatpush1.msra.mxu0 0.0
    %1021 = vmatprep.subr.mxu0 0.0
    %1022 = vmatpush1.msra.mxu0 0.0
    %1023 = vmatprep.subr.mxu0 0.0
    %1024 = vmatpush1.msra.mxu0 0.0
    %1025 = vmatprep.subr.mxu0 0.0
    %1026 = vmatpush1.msra.mxu0 0.0
    %1027 = vmatprep.subr.mxu0 0.0
    %1028 = vmatpush1.msra.mxu0 0.0
    %1029 = vmatprep.subr.mxu0 0.0
    %1030 = vmatpush1.msra.mxu0 0.0
    %1031 = vmatprep.subr.mxu0 0.0
    %1032 = vmatpush1.msra.mxu0 0.0
    %1033 = vmatprep.subr.mxu0 0.0
    %1034 = vmatpush1.msra.mxu0 0.0
    %1035 = vmatprep.subr.mxu0 0.0
    %1036 = vmatpush1.msra.mxu0 0.0
    %1037 = vmatprep.subr.mxu0 0.0
    %1038 = vmatpush1.msra.mxu0 0.0
    %1039 = vmatprep.subr.mxu0 0.0
    %1040 = vmatpush1.msra.mxu0 0.0
    %1041 = vmatprep.subr.mxu0 0.0
    %1042 = vmatpush1.msra.mxu0 0.0
    %1043 = vmatprep.subr.mxu0 0.0
    %1044 = vmatpush1.msra.mxu0 0.0
    %1045 = vmatprep.subr.mxu0 0.0
    %1046 = vmatpush1.msra.mxu0 0.0
    %1047 = vmatprep.subr.mxu0 0.0
    %1048 = vmatpush1.msra.mxu0 0.0
    %1049 = vmatprep.subr.mxu0 0.0
    %1050 = vmatpush1.msra.mxu0 0.0
    %1051 = vmatprep.subr.mxu0 0.0
    %1052 = vmatpush1.msra.mxu0 0.0
    %1053 = vmatprep.subr.mxu0 0.0
    %1054 = vmatpush1.msra.mxu0 0.0
    %1055 = vmatprep.subr.mxu0 0.0
    %1056 = vmatpush1.msra.mxu0 0.0
    %1057 = vmatprep.subr.mxu0 0.0
    %1058 = vmatpush1.msra.mxu0 0.0
    %1059 = vmatprep.subr.mxu0 0.0
    %1060 = vmatpush1.msra.mxu0 0.0
    %1061 = vmatprep.subr.mxu0 0.0
    %1062 = vmatpush1.msra.mxu0 0.0
    %1063 = vmatprep.subr.mxu0 0.0
    %1064 = vmatpush1.msra.mxu0 0.0
    %1065 = vmatprep.subr.mxu0 0.0
    %1066 = vmatpush1.msra.mxu0 0.0
    %1067 = vmatprep.subr.mxu0 0.0
    %1068 = vmatpush1.msra.mxu0 0.0
    %1069 = vmatprep.subr.mxu0 0.0
    %1070 = vmatpush1.msra.mxu0 0.0
    %1071 = vmatprep.subr.mxu0 0.0
    %1072 = vmatpush1.msra.mxu0 0.0
    %1073 = vmatprep.subr.mxu0 0.0
    %1074 = vmatpush1.msra.mxu0 0.0
    %1075 = vmatprep.subr.mxu0 0.0
    %1076 = vmatpush1.msra.mxu0 0.0
    %1077 = vmatprep.subr.mxu0 0.0
    %1078 = vmatpush1.msra.mxu0 0.0
    %1079 = vmatprep.mubr.f32.mxu0 0.0
    %1080 = vmatmul.mubr.f32.gmra.mrb[0].mxu0 %v1010
    %v1081 = vpop.f32.mrb[0].mxu0
    %v1082 = vadd.f32 %v1007, %v1081
    %v1083 = vpop.f32.mrb[0].mxu0
    %1084 = vdwg.mxu0
    %vm1085 = vcmask 39936
    %1086 = vst.msk [vmem:[#allocation3] sm:$0xff] %vm1085, %v1082
    // Predicated region
    $region26: #{tpu_custom_call.1} parent=1 // pred_check
      _
    $region27: #{tpu_custom_call.1} parent=1 // pred_check_branch
      %1088 = sbr.rel (0) target = $region29
    $region28: #{tpu_custom_call.1} parent=1 // pred_region
      %s1090 = ssub.s32 128, 128
      %1091 = vsyncadd [#allocation4], %s1090
      %s1093 = sshll.u32 [#allocation3], 4
      %s1094 = int_to_ptr.vmem [resolvable:$true] %s1093
      %1096 = dma.vmem_to_hbm [thread:$0]  %s1094, 128, %s6, [#allocation4]
    $region29: #{tpu_custom_call.1} parent=1 // pred_fallthru
      _
    // Predicated region
    $region30: #{tpu_custom_call.1} parent=1 // pred_check
      _
    $region31: #{tpu_custom_call.1} parent=1 // pred_check_branch
      %1098 = sbr.rel (0) target = $region33
    $region32: #{tpu_custom_call.1} parent=1 // pred_region
      %1099 = dma.done [#allocation4], 128
    $region33: #{tpu_custom_call.1} parent=1 // pred_fallthru
      _
    %1100 = vsyncpa [#allocation4], 1

</llo_original>
